<compile_context>
chip_gen: v6e
topology: v6e:2x2x1
jax: 0.10.0
libtpu: 0.0.40
codegen_flags: <defaults>
</compile_context>

<pallas_src>
import functools

import jax
import jax.numpy as jnp
from jax.experimental import pallas as pl
from jax.experimental.pallas import tpu as pltpu


IN_FEATURES = 2048  # fixed by the module: nn.Linear(2048, num_classes)


def _round_up(x, m):
    return ((x + m - 1) // m) * m


def _linear_kernel(x_ref, w_ref, b_ref, o_ref):
    # x_ref: (TB, K) f32  -- cast to bf16 here (VPU work, hidden under DMA)
    # w_ref: (K, TN) bf16 -- prepared once at init
    # b_ref: (1, TN) f32
    # o_ref: (TB, TN) f32
    x = x_ref[...].astype(jnp.bfloat16)
    acc = jnp.dot(x, w_ref[...], preferred_element_type=jnp.float32)
    o_ref[...] = (acc + b_ref[...]).astype(o_ref.dtype)


def prepare_params(weight, bias):
    """One-time (init-time) parameter prep, kept OUT of the per-call forward.

    * zero-pad num_classes up to a multiple of 128 (lane-dense output stores)
    * transpose to (K, N_pad) so the kernel uses a plain jnp.dot
    * cast weight to bf16 (halves weight HBM traffic); bias stays f32
    The zero padding must stay zero (padded class columns are sliced off).
    """
    N, K = weight.shape
    N_pad = _round_up(max(N, 128), 128)
    w, b = weight, bias
    if N_pad != N:
        w = jnp.pad(weight, ((0, N_pad - N), (0, 0)))
        b = jnp.pad(bias, (0, N_pad - N))
    w_t = jnp.asarray(w.T, dtype=jnp.bfloat16)             # (K, N_pad)
    b2d = jnp.asarray(b, dtype=jnp.float32).reshape(1, N_pad)
    return w_t, b2d


@functools.partial(jax.jit, static_argnames=("num_classes", "tile_b", "tile_n"))
def rank_forward(x, w_t, b2d, *, num_classes, tile_b=512, tile_n=1024):
    """x: (B, 2048) f32/bf16; w_t: (2048, N_pad) bf16; b2d: (1, N_pad) f32."""
    B, K = x.shape
    Kw, N_pad = w_t.shape
    assert K == Kw, (K, Kw)

    # ---- batch tiling -------------------------------------------------------
    # Memory-bound kernel: large tiles amortize the ~0.35 us per-grid-step cost.
    # f32 x sublane quantum is 8; use 16 when possible so bf16 x also packs.
    sub = 16 if B >= 16 else 8
    TILE_B = min(tile_b, _round_up(B, sub))
    n_b = pl.cdiv(B, TILE_B)
    # v7x: the "parallel" batch axis shards across the 2 TensorCores; ensure
    # >= 2 batch steps whenever B is big enough so neither TC sits idle.
    if n_b < 2 and B > sub:
        TILE_B = _round_up(pl.cdiv(B, 2), sub)
        n_b = pl.cdiv(B, TILE_B)

    # ---- class (N) tiling ---------------------------------------------------
    # Small num_classes (common case): one N step -> weight/bias index_maps are
    # constant -> resident in VMEM.  Large num_classes: weight streams in
    # TILE_N-wide column blocks, bounding the resident footprint (v7x VMEM).
    TILE_N = min(tile_n, N_pad)
    n_n = pl.cdiv(N_pad, TILE_N)

    grid = (n_b, n_n)

    # Double-buffered VMEM footprint: x (f32) + weight (bf16) + bias + out (f32)
    vmem_needed = 2 * (TILE_B * K * x.dtype.itemsize
                       + K * TILE_N * 2
                       + TILE_N * 4
                       + TILE_B * TILE_N * 4)
    vmem_limit = int(min(max(vmem_needed + (2 << 20), 32 << 20), 64 << 20))

    bytes_accessed = (x.size * x.dtype.itemsize
                      + w_t.size * 2
                      + b2d.size * 4
                      + B * N_pad * 4)

    out = pl.pallas_call(
        _linear_kernel,
        out_shape=jax.ShapeDtypeStruct((B, N_pad), jnp.float32),
        grid=grid,
        in_specs=[
            # x: tiled over batch; constant in j, so it is NOT re-DMA'd across
            # the inner N steps.
            pl.BlockSpec((TILE_B, K), lambda i, j: (i, 0)),
            # weight: tiled over N only; fully resident when n_n == 1.
            pl.BlockSpec((K, TILE_N), lambda i, j: (0, j)),
            # bias: tiled over N only.
            pl.BlockSpec((1, TILE_N), lambda i, j: (0, j)),
        ],
        out_specs=pl.BlockSpec((TILE_B, TILE_N), lambda i, j: (i, j)),
        compiler_params=pltpu.CompilerParams(
            dimension_semantics=("parallel", "parallel"),
            vmem_limit_bytes=vmem_limit,
        ),
        cost_estimate=pl.CostEstimate(
            flops=2 * B * K * N_pad,
            transcendentals=0,
            bytes_accessed=bytes_accessed,
        ),
    )(x, w_t, b2d)

    # Drop zero-padded class columns (padded weight rows / bias entries are 0).
    return out[:, :num_classes] if N_pad != num_classes else out


if __name__ == "__main__":
    key = jax.random.PRNGKey(0)
    k_x, k_w, k_b = jax.random.split(key, 3)

    batch = 8
    num_classes = 16

    x = jax.random.normal(k_x, (batch, IN_FEATURES), dtype=jnp.float32)
    # Deterministic synthetic parameters (PyTorch layout: (out, in) and (out,))
    weight = jax.random.normal(k_w, (num_classes, IN_FEATURES), dtype=jnp.float32) * 0.02
    bias = jax.random.normal(k_b, (num_classes,), dtype=jnp.float32) * 0.02

    # One-time parameter preparation (pad / transpose / bf16 cast) -- init time,
    # NOT part of the per-call forward.
    w_t, b2d = prepare_params(weight, bias)

    out = rank_forward(x, w_t, b2d, num_classes=num_classes)
    jax.block_until_ready(out)
    assert out.shape == (batch, num_classes)
    assert out.dtype == jnp.float32

    # Reference with identical bf16-input / f32-accumulate numerics.
    ref = (
        jnp.dot(
            x.astype(jnp.bfloat16),
            weight.T.astype(jnp.bfloat16),
            preferred_element_type=jnp.float32,
        )
        + bias
    )
    assert jnp.allclose(out, ref, atol=2e-3, rtol=2e-3)

    # Loose check against the full-precision reference (bf16 input rounding).
    ref_f32 = x @ weight.T + bias
    assert jnp.allclose(out, ref_f32, atol=5e-2, rtol=5e-2)

    print("KERNEL_OK")
</pallas_src>

<mosaic_0001>
module attributes {stable_mosaic.version = 11 : i64} {
  func.func @_linear_kernel(%arg0: i32, %arg1: i32, %arg2: memref<8x2048xf32, #tpu.memory_space<vmem>>, %arg3: memref<2048x128xbf16, #tpu.memory_space<vmem>>, %arg4: memref<1x128xf32, #tpu.memory_space<vmem>>, %arg5: memref<8x128xf32, #tpu.memory_space<vmem>>) attributes {dimension_semantics = [#tpu.dimension_semantics<parallel>, #tpu.dimension_semantics<parallel>], iteration_bounds = array<i64: 1, 1>, scalar_prefetch = 0 : i64, scratch_operands = 0 : i64, tpu.core_type = #tpu.core_type<tc>, window_params = [{transform_indices = @transform_0, window_bounds = array<i64: 8, 2048>}, {transform_indices = @transform_1, window_bounds = array<i64: 2048, 128>}, {transform_indices = @transform_2, window_bounds = array<i64: 1, 128>}, {transform_indices = @transform_3, window_bounds = array<i64: 8, 128>}]} {
    %c0 = arith.constant 0 : index
    %c0_0 = arith.constant 0 : index
    %0 = vector.load %arg2[%c0, %c0_0] : memref<8x2048xf32, #tpu.memory_space<vmem>>, vector<8x2048xf32>
    %1 = arith.truncf %0 : vector<8x2048xf32> to vector<8x2048xbf16>
    %c0_1 = arith.constant 0 : index
    %c0_2 = arith.constant 0 : index
    %2 = vector.load %arg3[%c0_1, %c0_2] : memref<2048x128xbf16, #tpu.memory_space<vmem>>, vector<2048x128xbf16>
    %cst = arith.constant dense<0.000000e+00> : vector<8x128xf32>
    %3 = tpu.matmul %1, %2, %cst {dimension_numbers = #tpu.dot_dimension_numbers<[1], [0], [0], [1], [0, 0, 1, 1], [], []>} : vector<8x2048xbf16>, vector<2048x128xbf16>, vector<8x128xf32> -> vector<8x128xf32>
    %c0_3 = arith.constant 0 : index
    %c0_4 = arith.constant 0 : index
    %4 = vector.load %arg4[%c0_3, %c0_4] : memref<1x128xf32, #tpu.memory_space<vmem>>, vector<1x128xf32>
    %5 = vector.broadcast %4 : vector<1x128xf32> to vector<8x128xf32>
    %6 = arith.addf %3, %5 : vector<8x128xf32>
    %c0_5 = arith.constant 0 : index
    %c0_6 = arith.constant 0 : index
    %7 = vector.load %arg5[%c0_5, %c0_6] : memref<8x128xf32, #tpu.memory_space<vmem>>, vector<8x128xf32>
    tpu.vector_store %arg5[%c0_5, %c0_6], %6 {strides = array<i32>} : memref<8x128xf32, #tpu.memory_space<vmem>>, vector<8x128xf32>,
    return
  }
  func.func @transform_0(%arg0: i32, %arg1: i32) -> (i32, i32) {
    %c0_i32 = arith.constant 0 : i32
    %c0_i32_0 = arith.constant 0 : i32
    return %arg0, %c0_i32 : i32, i32
  }
  func.func @transform_1(%arg0: i32, %arg1: i32) -> (i32, i32) {
    %c0_i32 = arith.constant 0 : i32
    %c0_i32_0 = arith.constant 0 : i32
    return %c0_i32, %arg1 : i32, i32
  }
  func.func @transform_2(%arg0: i32, %arg1: i32) -> (i32, i32) {
    %c0_i32 = arith.constant 0 : i32
    %c0_i32_0 = arith.constant 0 : i32
    return %c0_i32, %arg1 : i32, i32
  }
  func.func @transform_3(%arg0: i32, %arg1: i32) -> (i32, i32) {
    %c0_i32 = arith.constant 0 : i32
    return %arg0, %arg1 : i32, i32
  }
}

</mosaic_0001>

<llo_original>
// kernel: rank_forward.1
$region0: #{rank_forward.1}
  #allocation0 [shape = 'u32[]', space=smem, size = 0x4, offset = 0x4, fixed_abs, tag = 'smem constant byte address 0x4 - core index']
  #allocation1 [shape = 'u32[144,128]{1,0:T(1,128)}', space=vmem, size = 0x12000, scoped, tag = 'internal scratch']
  %s0 = inlined_call_operand.hbm [shape: f32[8,2048], index: 0, kind: input, shape index: {}]
  %s1 = inlined_call_operand.hbm [shape: bf16[2048,128], index: 1, kind: input, shape index: {}]
  %s2 = inlined_call_operand.vmem [shape: f32[1,128], index: 2, kind: input, shape index: {}]
  %s3 = inlined_call_operand.hbm [shape: f32[8,128], index: 3, kind: output, shape index: {}]
  %s4 = sld [smem:[#allocation0]]
  $region30: #{rank_forward.1} parent=0
    _
  %s6 = ssub.s32 1, %s4
  %s7 = scalar_select 0, %s6, %s4
  $region1: #{rank_forward.1} parent=0
    #allocation2 [shape = 'u8[65536]{0}', space=vmem, size = 0x10000, scoped, tag = 'input window, operand 0, single buffered']
    #allocation3 [shape = 's32[1]{0}', space=sflag, size = 0x4, scoped, tag = 'scoped memory for rank_forward.1']
    #allocation4 [shape = 's32[1]{0}', space=sflag, size = 0x4, scoped, tag = 'scoped memory for rank_forward.1']
    #allocation5 [shape = 'u8[524288]{0}', space=vmem, size = 0x80000, scoped, tag = 'input window, operand 1, single buffered']
    #allocation6 [shape = 's32[1]{0}', space=sflag, size = 0x4, scoped, tag = 'scoped memory for rank_forward.1']
    #allocation7 [shape = 'u8[4096]{0}', space=vmem, size = 0x1000, scoped, tag = 'output window, operand 0, single buffered']
    %8 = vsyncpa [#allocation3], 0
    %9 = vsyncpa [#allocation6], 0
    %10 = vsyncpa [#allocation4], 0
    // Predicated region
    $region2: #{rank_forward.1} parent=1 // pred_check
      _
    $region3: #{rank_forward.1} parent=1 // pred_check_branch
      %12 = sbr.rel (0) target = $region5
    $region4: #{rank_forward.1} parent=1 // pred_region
      %s14 = ssub.s32 2048, 2048
      %15 = vsyncadd [#allocation3], %s14
      %s17 = sshll.u32 [#allocation2], 4
      %s18 = int_to_ptr.vmem [resolvable:$true] %s17
      %20 = dma.hbm_to_vmem [thread:$0]  %s0, 2048, %s18, [#allocation3]
    $region5: #{rank_forward.1} parent=1 // pred_fallthru
      _
    // Predicated region
    $region6: #{rank_forward.1} parent=1 // pred_check
      _
    $region7: #{rank_forward.1} parent=1 // pred_check_branch
      %22 = sbr.rel (0) target = $region9
    $region8: #{rank_forward.1} parent=1 // pred_region
      %s24 = ssub.s32 16384, 16384
      %25 = vsyncadd [#allocation6], %s24
      %s26 = sshll.u32 [#allocation5], 4
      %s27 = int_to_ptr.vmem [resolvable:$true] %s26
      %32 = dma.hbm_to_vmem [thread:$0]  %s1, 16384, %s27, [#allocation6], 64, 64, 4
    $region9: #{rank_forward.1} parent=1 // pred_fallthru
      _
    // Predicated region
    $region10: #{rank_forward.1} parent=1 // pred_check
      _
    $region11: #{rank_forward.1} parent=1 // pred_check_branch
      %34 = sbr.rel (0) target = $region13
    $region12: #{rank_forward.1} parent=1 // pred_region
      _
    $region13: #{rank_forward.1} parent=1 // pred_fallthru
      _
    // Predicated region
    $region14: #{rank_forward.1} parent=1 // pred_check
      _
    $region15: #{rank_forward.1} parent=1 // pred_check_branch
      %36 = sbr.rel (0) target = $region17
    $region16: #{rank_forward.1} parent=1 // pred_region
      %37 = dma.done [#allocation3], 2048
    $region17: #{rank_forward.1} parent=1 // pred_fallthru
      _
    // Predicated region
    $region18: #{rank_forward.1} parent=1 // pred_check
      _
    $region19: #{rank_forward.1} parent=1 // pred_check_branch
      %39 = sbr.rel (0) target = $region21
    $region20: #{rank_forward.1} parent=1 // pred_region
      %40 = dma.done [#allocation6], 16384
    $region21: #{rank_forward.1} parent=1 // pred_fallthru
      _
    %v42 = vld [vmem:[#allocation2] sm:$0xff]
    %v43 = vld [vmem:[#allocation2 + $0x8] sm:$0xff]
    %v44 = vld [vmem:[#allocation2 + $0x10] sm:$0xff]
    %v45 = vld [vmem:[#allocation2 + $0x18] sm:$0xff]
    %v46 = vld [vmem:[#allocation2 + $0x20] sm:$0xff]
    %v47 = vld [vmem:[#allocation2 + $0x28] sm:$0xff]
    %v48 = vld [vmem:[#allocation2 + $0x30] sm:$0xff]
    %v49 = vld [vmem:[#allocation2 + $0x38] sm:$0xff]
    %v50 = vld [vmem:[#allocation2 + $0x40] sm:$0xff]
    %v51 = vld [vmem:[#allocation2 + $0x48] sm:$0xff]
    %v52 = vld [vmem:[#allocation2 + $0x50] sm:$0xff]
    %v53 = vld [vmem:[#allocation2 + $0x58] sm:$0xff]
    %v54 = vld [vmem:[#allocation2 + $0x60] sm:$0xff]
    %v55 = vld [vmem:[#allocation2 + $0x68] sm:$0xff]
    %v56 = vld [vmem:[#allocation2 + $0x70] sm:$0xff]
    %v57 = vld [vmem:[#allocation2 + $0x78] sm:$0xff]
    %v58 = vpack.c.bf16 %v42, %v42
    %v59 = vpack.c.bf16 %v43, %v43
    %v60 = vpack.c.bf16 %v44, %v44
    %v61 = vpack.c.bf16 %v45, %v45
    %v62 = vpack.c.bf16 %v46, %v46
    %v63 = vpack.c.bf16 %v47, %v47
    %v64 = vpack.c.bf16 %v48, %v48
    %v65 = vpack.c.bf16 %v49, %v49
    %v66 = vpack.c.bf16 %v50, %v50
    %v67 = vpack.c.bf16 %v51, %v51
    %v68 = vpack.c.bf16 %v52, %v52
    %v69 = vpack.c.bf16 %v53, %v53
    %v70 = vpack.c.bf16 %v54, %v54
    %v71 = vpack.c.bf16 %v55, %v55
    %v72 = vpack.c.bf16 %v56, %v56
    %v73 = vpack.c.bf16 %v57, %v57
    %v74 = vld [vmem:[#allocation5] sm:$0xf]
    %v75 = vld [vmem:[#allocation5 + $0x4] sm:$0xf]
    %v76 = vld [vmem:[#allocation5 + $0x8] sm:$0xf]
    %v77 = vld [vmem:[#allocation5 + $0xc] sm:$0xf]
    %v78 = vld [vmem:[#allocation5 + $0x10] sm:$0xf]
    %v79 = vld [vmem:[#allocation5 + $0x14] sm:$0xf]
    %v80 = vld [vmem:[#allocation5 + $0x18] sm:$0xf]
    %v81 = vld [vmem:[#allocation5 + $0x1c] sm:$0xf]
    %v82 = vld [vmem:[#allocation5 + $0x20] sm:$0xf]
    %v83 = vld [vmem:[#allocation5 + $0x24] sm:$0xf]
    %v84 = vld [vmem:[#allocation5 + $0x28] sm:$0xf]
    %v85 = vld [vmem:[#allocation5 + $0x2c] sm:$0xf]
    %v86 = vld [vmem:[#allocation5 + $0x30] sm:$0xf]
    %v87 = vld [vmem:[#allocation5 + $0x34] sm:$0xf]
    %v88 = vld [vmem:[#allocation5 + $0x38] sm:$0xf]
    %v89 = vld [vmem:[#allocation5 + $0x3c] sm:$0xf]
    %v90 = vld [vmem:[#allocation5 + $0x40] sm:$0xf]
    %v91 = vld [vmem:[#allocation5 + $0x44] sm:$0xf]
    %v92 = vld [vmem:[#allocation5 + $0x48] sm:$0xf]
    %v93 = vld [vmem:[#allocation5 + $0x4c] sm:$0xf]
    %v94 = vld [vmem:[#allocation5 + $0x50] sm:$0xf]
    %v95 = vld [vmem:[#allocation5 + $0x54] sm:$0xf]
    %v96 = vld [vmem:[#allocation5 + $0x58] sm:$0xf]
    %v97 = vld [vmem:[#allocation5 + $0x5c] sm:$0xf]
    %v98 = vld [vmem:[#allocation5 + $0x60] sm:$0xf]
    %v99 = vld [vmem:[#allocation5 + $0x64] sm:$0xf]
    %v100 = vld [vmem:[#allocation5 + $0x68] sm:$0xf]
    %v101 = vld [vmem:[#allocation5 + $0x6c] sm:$0xf]
    %v102 = vld [vmem:[#allocation5 + $0x70] sm:$0xf]
    %v103 = vld [vmem:[#allocation5 + $0x74] sm:$0xf]
    %v104 = vld [vmem:[#allocation5 + $0x78] sm:$0xf]
    %v105 = vld [vmem:[#allocation5 + $0x7c] sm:$0xf]
    %v106 = vld [vmem:[#allocation5 + $0x80] sm:$0xf]
    %v107 = vld [vmem:[#allocation5 + $0x84] sm:$0xf]
    %v108 = vld [vmem:[#allocation5 + $0x88] sm:$0xf]
    %v109 = vld [vmem:[#allocation5 + $0x8c] sm:$0xf]
    %v110 = vld [vmem:[#allocation5 + $0x90] sm:$0xf]
    %v111 = vld [vmem:[#allocation5 + $0x94] sm:$0xf]
    %v112 = vld [vmem:[#allocation5 + $0x98] sm:$0xf]
    %v113 = vld [vmem:[#allocation5 + $0x9c] sm:$0xf]
    %v114 = vld [vmem:[#allocation5 + $0xa0] sm:$0xf]
    %v115 = vld [vmem:[#allocation5 + $0xa4] sm:$0xf]
    %v116 = vld [vmem:[#allocation5 + $0xa8] sm:$0xf]
    %v117 = vld [vmem:[#allocation5 + $0xac] sm:$0xf]
    %v118 = vld [vmem:[#allocation5 + $0xb0] sm:$0xf]
    %v119 = vld [vmem:[#allocation5 + $0xb4] sm:$0xf]
    %v120 = vld [vmem:[#allocation5 + $0xb8] sm:$0xf]
    %v121 = vld [vmem:[#allocation5 + $0xbc] sm:$0xf]
    %v122 = vld [vmem:[#allocation5 + $0xc0] sm:$0xf]
    %v123 = vld [vmem:[#allocation5 + $0xc4] sm:$0xf]
    %v124 = vld [vmem:[#allocation5 + $0xc8] sm:$0xf]
    %v125 = vld [vmem:[#allocation5 + $0xcc] sm:$0xf]
    %v126 = vld [vmem:[#allocation5 + $0xd0] sm:$0xf]
    %v127 = vld [vmem:[#allocation5 + $0xd4] sm:$0xf]
    %v128 = vld [vmem:[#allocation5 + $0xd8] sm:$0xf]
    %v129 = vld [vmem:[#allocation5 + $0xdc] sm:$0xf]
    %v130 = vld [vmem:[#allocation5 + $0xe0] sm:$0xf]
    %v131 = vld [vmem:[#allocation5 + $0xe4] sm:$0xf]
    %v132 = vld [vmem:[#allocation5 + $0xe8] sm:$0xf]
    %v133 = vld [vmem:[#allocation5 + $0xec] sm:$0xf]
    %v134 = vld [vmem:[#allocation5 + $0xf0] sm:$0xf]
    %v135 = vld [vmem:[#allocation5 + $0xf4] sm:$0xf]
    %v136 = vld [vmem:[#allocation5 + $0xf8] sm:$0xf]
    %v137 = vld [vmem:[#allocation5 + $0xfc] sm:$0xf]
    %v138 = vld [vmem:[#allocation5 + $0x100] sm:$0xf]
    %v139 = vld [vmem:[#allocation5 + $0x104] sm:$0xf]
    %v140 = vld [vmem:[#allocation5 + $0x108] sm:$0xf]
    %v141 = vld [vmem:[#allocation5 + $0x10c] sm:$0xf]
    %v142 = vld [vmem:[#allocation5 + $0x110] sm:$0xf]
    %v143 = vld [vmem:[#allocation5 + $0x114] sm:$0xf]
    %v144 = vld [vmem:[#allocation5 + $0x118] sm:$0xf]
    %v145 = vld [vmem:[#allocation5 + $0x11c] sm:$0xf]
    %v146 = vld [vmem:[#allocation5 + $0x120] sm:$0xf]
    %v147 = vld [vmem:[#allocation5 + $0x124] sm:$0xf]
    %v148 = vld [vmem:[#allocation5 + $0x128] sm:$0xf]
    %v149 = vld [vmem:[#allocation5 + $0x12c] sm:$0xf]
    %v150 = vld [vmem:[#allocation5 + $0x130] sm:$0xf]
    %v151 = vld [vmem:[#allocation5 + $0x134] sm:$0xf]
    %v152 = vld [vmem:[#allocation5 + $0x138] sm:$0xf]
    %v153 = vld [vmem:[#allocation5 + $0x13c] sm:$0xf]
    %v154 = vld [vmem:[#allocation5 + $0x140] sm:$0xf]
    %v155 = vld [vmem:[#allocation5 + $0x144] sm:$0xf]
    %v156 = vld [vmem:[#allocation5 + $0x148] sm:$0xf]
    %v157 = vld [vmem:[#allocation5 + $0x14c] sm:$0xf]
    %v158 = vld [vmem:[#allocation5 + $0x150] sm:$0xf]
    %v159 = vld [vmem:[#allocation5 + $0x154] sm:$0xf]
    %v160 = vld [vmem:[#allocation5 + $0x158] sm:$0xf]
    %v161 = vld [vmem:[#allocation5 + $0x15c] sm:$0xf]
    %v162 = vld [vmem:[#allocation5 + $0x160] sm:$0xf]
    %v163 = vld [vmem:[#allocation5 + $0x164] sm:$0xf]
    %v164 = vld [vmem:[#allocation5 + $0x168] sm:$0xf]
    %v165 = vld [vmem:[#allocation5 + $0x16c] sm:$0xf]
    %v166 = vld [vmem:[#allocation5 + $0x170] sm:$0xf]
    %v167 = vld [vmem:[#allocation5 + $0x174] sm:$0xf]
    %v168 = vld [vmem:[#allocation5 + $0x178] sm:$0xf]
    %v169 = vld [vmem:[#allocation5 + $0x17c] sm:$0xf]
    %v170 = vld [vmem:[#allocation5 + $0x180] sm:$0xf]
    %v171 = vld [vmem:[#allocation5 + $0x184] sm:$0xf]
    %v172 = vld [vmem:[#allocation5 + $0x188] sm:$0xf]
    %v173 = vld [vmem:[#allocation5 + $0x18c] sm:$0xf]
    %v174 = vld [vmem:[#allocation5 + $0x190] sm:$0xf]
    %v175 = vld [vmem:[#allocation5 + $0x194] sm:$0xf]
    %v176 = vld [vmem:[#allocation5 + $0x198] sm:$0xf]
    %v177 = vld [vmem:[#allocation5 + $0x19c] sm:$0xf]
    %v178 = vld [vmem:[#allocation5 + $0x1a0] sm:$0xf]
    %v179 = vld [vmem:[#allocation5 + $0x1a4] sm:$0xf]
    %v180 = vld [vmem:[#allocation5 + $0x1a8] sm:$0xf]
    %v181 = vld [vmem:[#allocation5 + $0x1ac] sm:$0xf]
    %v182 = vld [vmem:[#allocation5 + $0x1b0] sm:$0xf]
    %v183 = vld [vmem:[#allocation5 + $0x1b4] sm:$0xf]
    %v184 = vld [vmem:[#allocation5 + $0x1b8] sm:$0xf]
    %v185 = vld [vmem:[#allocation5 + $0x1bc] sm:$0xf]
    %v186 = vld [vmem:[#allocation5 + $0x1c0] sm:$0xf]
    %v187 = vld [vmem:[#allocation5 + $0x1c4] sm:$0xf]
    %v188 = vld [vmem:[#allocation5 + $0x1c8] sm:$0xf]
    %v189 = vld [vmem:[#allocation5 + $0x1cc] sm:$0xf]
    %v190 = vld [vmem:[#allocation5 + $0x1d0] sm:$0xf]
    %v191 = vld [vmem:[#allocation5 + $0x1d4] sm:$0xf]
    %v192 = vld [vmem:[#allocation5 + $0x1d8] sm:$0xf]
    %v193 = vld [vmem:[#allocation5 + $0x1dc] sm:$0xf]
    %v194 = vld [vmem:[#allocation5 + $0x1e0] sm:$0xf]
    %v195 = vld [vmem:[#allocation5 + $0x1e4] sm:$0xf]
    %v196 = vld [vmem:[#allocation5 + $0x1e8] sm:$0xf]
    %v197 = vld [vmem:[#allocation5 + $0x1ec] sm:$0xf]
    %v198 = vld [vmem:[#allocation5 + $0x1f0] sm:$0xf]
    %v199 = vld [vmem:[#allocation5 + $0x1f4] sm:$0xf]
    %v200 = vld [vmem:[#allocation5 + $0x1f8] sm:$0xf]
    %v201 = vld [vmem:[#allocation5 + $0x1fc] sm:$0xf]
    %v202 = vld [vmem:[#allocation5 + $0x200] sm:$0xf]
    %v203 = vld [vmem:[#allocation5 + $0x204] sm:$0xf]
    %v204 = vld [vmem:[#allocation5 + $0x208] sm:$0xf]
    %v205 = vld [vmem:[#allocation5 + $0x20c] sm:$0xf]
    %v206 = vld [vmem:[#allocation5 + $0x210] sm:$0xf]
    %v207 = vld [vmem:[#allocation5 + $0x214] sm:$0xf]
    %v208 = vld [vmem:[#allocation5 + $0x218] sm:$0xf]
    %v209 = vld [vmem:[#allocation5 + $0x21c] sm:$0xf]
    %v210 = vld [vmem:[#allocation5 + $0x220] sm:$0xf]
    %v211 = vld [vmem:[#allocation5 + $0x224] sm:$0xf]
    %v212 = vld [vmem:[#allocation5 + $0x228] sm:$0xf]
    %v213 = vld [vmem:[#allocation5 + $0x22c] sm:$0xf]
    %v214 = vld [vmem:[#allocation5 + $0x230] sm:$0xf]
    %v215 = vld [vmem:[#allocation5 + $0x234] sm:$0xf]
    %v216 = vld [vmem:[#allocation5 + $0x238] sm:$0xf]
    %v217 = vld [vmem:[#allocation5 + $0x23c] sm:$0xf]
    %v218 = vld [vmem:[#allocation5 + $0x240] sm:$0xf]
    %v219 = vld [vmem:[#allocation5 + $0x244] sm:$0xf]
    %v220 = vld [vmem:[#allocation5 + $0x248] sm:$0xf]
    %v221 = vld [vmem:[#allocation5 + $0x24c] sm:$0xf]
    %v222 = vld [vmem:[#allocation5 + $0x250] sm:$0xf]
    %v223 = vld [vmem:[#allocation5 + $0x254] sm:$0xf]
    %v224 = vld [vmem:[#allocation5 + $0x258] sm:$0xf]
    %v225 = vld [vmem:[#allocation5 + $0x25c] sm:$0xf]
    %v226 = vld [vmem:[#allocation5 + $0x260] sm:$0xf]
    %v227 = vld [vmem:[#allocation5 + $0x264] sm:$0xf]
    %v228 = vld [vmem:[#allocation5 + $0x268] sm:$0xf]
    %v229 = vld [vmem:[#allocation5 + $0x26c] sm:$0xf]
    %v230 = vld [vmem:[#allocation5 + $0x270] sm:$0xf]
    %v231 = vld [vmem:[#allocation5 + $0x274] sm:$0xf]
    %v232 = vld [vmem:[#allocation5 + $0x278] sm:$0xf]
    %v233 = vld [vmem:[#allocation5 + $0x27c] sm:$0xf]
    %v234 = vld [vmem:[#allocation5 + $0x280] sm:$0xf]
    %v235 = vld [vmem:[#allocation5 + $0x284] sm:$0xf]
    %v236 = vld [vmem:[#allocation5 + $0x288] sm:$0xf]
    %v237 = vld [vmem:[#allocation5 + $0x28c] sm:$0xf]
    %v238 = vld [vmem:[#allocation5 + $0x290] sm:$0xf]
    %v239 = vld [vmem:[#allocation5 + $0x294] sm:$0xf]
    %v240 = vld [vmem:[#allocation5 + $0x298] sm:$0xf]
    %v241 = vld [vmem:[#allocation5 + $0x29c] sm:$0xf]
    %v242 = vld [vmem:[#allocation5 + $0x2a0] sm:$0xf]
    %v243 = vld [vmem:[#allocation5 + $0x2a4] sm:$0xf]
    %v244 = vld [vmem:[#allocation5 + $0x2a8] sm:$0xf]
    %v245 = vld [vmem:[#allocation5 + $0x2ac] sm:$0xf]
    %v246 = vld [vmem:[#allocation5 + $0x2b0] sm:$0xf]
    %v247 = vld [vmem:[#allocation5 + $0x2b4] sm:$0xf]
    %v248 = vld [vmem:[#allocation5 + $0x2b8] sm:$0xf]
    %v249 = vld [vmem:[#allocation5 + $0x2bc] sm:$0xf]
    %v250 = vld [vmem:[#allocation5 + $0x2c0] sm:$0xf]
    %v251 = vld [vmem:[#allocation5 + $0x2c4] sm:$0xf]
    %v252 = vld [vmem:[#allocation5 + $0x2c8] sm:$0xf]
    %v253 = vld [vmem:[#allocation5 + $0x2cc] sm:$0xf]
    %v254 = vld [vmem:[#allocation5 + $0x2d0] sm:$0xf]
    %v255 = vld [vmem:[#allocation5 + $0x2d4] sm:$0xf]
    %v256 = vld [vmem:[#allocation5 + $0x2d8] sm:$0xf]
    %v257 = vld [vmem:[#allocation5 + $0x2dc] sm:$0xf]
    %v258 = vld [vmem:[#allocation5 + $0x2e0] sm:$0xf]
    %v259 = vld [vmem:[#allocation5 + $0x2e4] sm:$0xf]
    %v260 = vld [vmem:[#allocation5 + $0x2e8] sm:$0xf]
    %v261 = vld [vmem:[#allocation5 + $0x2ec] sm:$0xf]
    %v262 = vld [vmem:[#allocation5 + $0x2f0] sm:$0xf]
    %v263 = vld [vmem:[#allocation5 + $0x2f4] sm:$0xf]
    %v264 = vld [vmem:[#allocation5 + $0x2f8] sm:$0xf]
    %v265 = vld [vmem:[#allocation5 + $0x2fc] sm:$0xf]
    %v266 = vld [vmem:[#allocation5 + $0x300] sm:$0xf]
    %v267 = vld [vmem:[#allocation5 + $0x304] sm:$0xf]
    %v268 = vld [vmem:[#allocation5 + $0x308] sm:$0xf]
    %v269 = vld [vmem:[#allocation5 + $0x30c] sm:$0xf]
    %v270 = vld [vmem:[#allocation5 + $0x310] sm:$0xf]
    %v271 = vld [vmem:[#allocation5 + $0x314] sm:$0xf]
    %v272 = vld [vmem:[#allocation5 + $0x318] sm:$0xf]
    %v273 = vld [vmem:[#allocation5 + $0x31c] sm:$0xf]
    %v274 = vld [vmem:[#allocation5 + $0x320] sm:$0xf]
    %v275 = vld [vmem:[#allocation5 + $0x324] sm:$0xf]
    %v276 = vld [vmem:[#allocation5 + $0x328] sm:$0xf]
    %v277 = vld [vmem:[#allocation5 + $0x32c] sm:$0xf]
    %v278 = vld [vmem:[#allocation5 + $0x330] sm:$0xf]
    %v279 = vld [vmem:[#allocation5 + $0x334] sm:$0xf]
    %v280 = vld [vmem:[#allocation5 + $0x338] sm:$0xf]
    %v281 = vld [vmem:[#allocation5 + $0x33c] sm:$0xf]
    %v282 = vld [vmem:[#allocation5 + $0x340] sm:$0xf]
    %v283 = vld [vmem:[#allocation5 + $0x344] sm:$0xf]
    %v284 = vld [vmem:[#allocation5 + $0x348] sm:$0xf]
    %v285 = vld [vmem:[#allocation5 + $0x34c] sm:$0xf]
    %v286 = vld [vmem:[#allocation5 + $0x350] sm:$0xf]
    %v287 = vld [vmem:[#allocation5 + $0x354] sm:$0xf]
    %v288 = vld [vmem:[#allocation5 + $0x358] sm:$0xf]
    %v289 = vld [vmem:[#allocation5 + $0x35c] sm:$0xf]
    %v290 = vld [vmem:[#allocation5 + $0x360] sm:$0xf]
    %v291 = vld [vmem:[#allocation5 + $0x364] sm:$0xf]
    %v292 = vld [vmem:[#allocation5 + $0x368] sm:$0xf]
    %v293 = vld [vmem:[#allocation5 + $0x36c] sm:$0xf]
    %v294 = vld [vmem:[#allocation5 + $0x370] sm:$0xf]
    %v295 = vld [vmem:[#allocation5 + $0x374] sm:$0xf]
    %v296 = vld [vmem:[#allocation5 + $0x378] sm:$0xf]
    %v297 = vld [vmem:[#allocation5 + $0x37c] sm:$0xf]
    %v298 = vld [vmem:[#allocation5 + $0x380] sm:$0xf]
    %v299 = vld [vmem:[#allocation5 + $0x384] sm:$0xf]
    %v300 = vld [vmem:[#allocation5 + $0x388] sm:$0xf]
    %v301 = vld [vmem:[#allocation5 + $0x38c] sm:$0xf]
    %v302 = vld [vmem:[#allocation5 + $0x390] sm:$0xf]
    %v303 = vld [vmem:[#allocation5 + $0x394] sm:$0xf]
    %v304 = vld [vmem:[#allocation5 + $0x398] sm:$0xf]
    %v305 = vld [vmem:[#allocation5 + $0x39c] sm:$0xf]
    %v306 = vld [vmem:[#allocation5 + $0x3a0] sm:$0xf]
    %v307 = vld [vmem:[#allocation5 + $0x3a4] sm:$0xf]
    %v308 = vld [vmem:[#allocation5 + $0x3a8] sm:$0xf]
    %v309 = vld [vmem:[#allocation5 + $0x3ac] sm:$0xf]
    %v310 = vld [vmem:[#allocation5 + $0x3b0] sm:$0xf]
    %v311 = vld [vmem:[#allocation5 + $0x3b4] sm:$0xf]
    %v312 = vld [vmem:[#allocation5 + $0x3b8] sm:$0xf]
    %v313 = vld [vmem:[#allocation5 + $0x3bc] sm:$0xf]
    %v314 = vld [vmem:[#allocation5 + $0x3c0] sm:$0xf]
    %v315 = vld [vmem:[#allocation5 + $0x3c4] sm:$0xf]
    %v316 = vld [vmem:[#allocation5 + $0x3c8] sm:$0xf]
    %v317 = vld [vmem:[#allocation5 + $0x3cc] sm:$0xf]
    %v318 = vld [vmem:[#allocation5 + $0x3d0] sm:$0xf]
    %v319 = vld [vmem:[#allocation5 + $0x3d4] sm:$0xf]
    %v320 = vld [vmem:[#allocation5 + $0x3d8] sm:$0xf]
    %v321 = vld [vmem:[#allocation5 + $0x3dc] sm:$0xf]
    %v322 = vld [vmem:[#allocation5 + $0x3e0] sm:$0xf]
    %v323 = vld [vmem:[#allocation5 + $0x3e4] sm:$0xf]
    %v324 = vld [vmem:[#allocation5 + $0x3e8] sm:$0xf]
    %v325 = vld [vmem:[#allocation5 + $0x3ec] sm:$0xf]
    %v326 = vld [vmem:[#allocation5 + $0x3f0] sm:$0xf]
    %v327 = vld [vmem:[#allocation5 + $0x3f4] sm:$0xf]
    %v328 = vld [vmem:[#allocation5 + $0x3f8] sm:$0xf]
    %v329 = vld [vmem:[#allocation5 + $0x3fc] sm:$0xf]
    %v330 = vld [vmem:[%s2] sm:$0x1]
    %v332 = vlaneseq
    %v333 = vshrl.u32 %v332, 7
    %v334 = vsub.s32 0, %v333
    %v335 = vrot.slane %v330, %v334
    %v593 = vunpack.c.l.b16 %v74
    %v594 = vunpack.c.l.b16 %v75
    %v595 = vunpack.c.l.b16 %v76
    %v596 = vunpack.c.l.b16 %v77
    %v597 = vunpack.c.l.b16 %v78
    %v598 = vunpack.c.l.b16 %v79
    %v599 = vunpack.c.l.b16 %v80
    %v600 = vunpack.c.l.b16 %v81
    %v601 = vunpack.c.l.b16 %v82
    %v602 = vunpack.c.l.b16 %v83
    %v603 = vunpack.c.l.b16 %v84
    %v604 = vunpack.c.l.b16 %v85
    %v605 = vunpack.c.l.b16 %v86
    %v606 = vunpack.c.l.b16 %v87
    %v607 = vunpack.c.l.b16 %v88
    %v608 = vunpack.c.l.b16 %v89
    %v609 = vunpack.c.l.b16 %v90
    %v610 = vunpack.c.l.b16 %v91
    %v611 = vunpack.c.l.b16 %v92
    %v612 = vunpack.c.l.b16 %v93
    %v613 = vunpack.c.l.b16 %v94
    %v614 = vunpack.c.l.b16 %v95
    %v615 = vunpack.c.l.b16 %v96
    %v616 = vunpack.c.l.b16 %v97
    %v617 = vunpack.c.l.b16 %v98
    %v618 = vunpack.c.l.b16 %v99
    %v619 = vunpack.c.l.b16 %v100
    %v620 = vunpack.c.l.b16 %v101
    %v621 = vunpack.c.l.b16 %v102
    %v622 = vunpack.c.l.b16 %v103
    %v623 = vunpack.c.l.b16 %v104
    %v624 = vunpack.c.l.b16 %v105
    %v625 = vunpack.c.l.b16 %v106
    %v626 = vunpack.c.l.b16 %v107
    %v627 = vunpack.c.l.b16 %v108
    %v628 = vunpack.c.l.b16 %v109
    %v629 = vunpack.c.l.b16 %v110
    %v630 = vunpack.c.l.b16 %v111
    %v631 = vunpack.c.l.b16 %v112
    %v632 = vunpack.c.l.b16 %v113
    %v633 = vunpack.c.l.b16 %v114
    %v634 = vunpack.c.l.b16 %v115
    %v635 = vunpack.c.l.b16 %v116
    %v636 = vunpack.c.l.b16 %v117
    %v637 = vunpack.c.l.b16 %v118
    %v638 = vunpack.c.l.b16 %v119
    %v639 = vunpack.c.l.b16 %v120
    %v640 = vunpack.c.l.b16 %v121
    %v641 = vunpack.c.l.b16 %v122
    %v642 = vunpack.c.l.b16 %v123
    %v643 = vunpack.c.l.b16 %v124
    %v644 = vunpack.c.l.b16 %v125
    %v645 = vunpack.c.l.b16 %v126
    %v646 = vunpack.c.l.b16 %v127
    %v647 = vunpack.c.l.b16 %v128
    %v648 = vunpack.c.l.b16 %v129
    %v649 = vunpack.c.l.b16 %v130
    %v650 = vunpack.c.l.b16 %v131
    %v651 = vunpack.c.l.b16 %v132
    %v652 = vunpack.c.l.b16 %v133
    %v653 = vunpack.c.l.b16 %v134
    %v654 = vunpack.c.l.b16 %v135
    %v655 = vunpack.c.l.b16 %v136
    %v656 = vunpack.c.l.b16 %v137
    %v657 = vunpack.c.l.b16 %v138
    %v658 = vunpack.c.l.b16 %v139
    %v659 = vunpack.c.l.b16 %v140
    %v660 = vunpack.c.l.b16 %v141
    %v661 = vunpack.c.l.b16 %v142
    %v662 = vunpack.c.l.b16 %v143
    %v663 = vunpack.c.l.b16 %v144
    %v664 = vunpack.c.l.b16 %v145
    %v665 = vunpack.c.l.b16 %v146
    %v666 = vunpack.c.l.b16 %v147
    %v667 = vunpack.c.l.b16 %v148
    %v668 = vunpack.c.l.b16 %v149
    %v669 = vunpack.c.l.b16 %v150
    %v670 = vunpack.c.l.b16 %v151
    %v671 = vunpack.c.l.b16 %v152
    %v672 = vunpack.c.l.b16 %v153
    %v673 = vunpack.c.l.b16 %v154
    %v674 = vunpack.c.l.b16 %v155
    %v675 = vunpack.c.l.b16 %v156
    %v676 = vunpack.c.l.b16 %v157
    %v677 = vunpack.c.l.b16 %v158
    %v678 = vunpack.c.l.b16 %v159
    %v679 = vunpack.c.l.b16 %v160
    %v680 = vunpack.c.l.b16 %v161
    %v681 = vunpack.c.l.b16 %v162
    %v682 = vunpack.c.l.b16 %v163
    %v683 = vunpack.c.l.b16 %v164
    %v684 = vunpack.c.l.b16 %v165
    %v685 = vunpack.c.l.b16 %v166
    %v686 = vunpack.c.l.b16 %v167
    %v687 = vunpack.c.l.b16 %v168
    %v688 = vunpack.c.l.b16 %v169
    %v689 = vunpack.c.l.b16 %v170
    %v690 = vunpack.c.l.b16 %v171
    %v691 = vunpack.c.l.b16 %v172
    %v692 = vunpack.c.l.b16 %v173
    %v693 = vunpack.c.l.b16 %v174
    %v694 = vunpack.c.l.b16 %v175
    %v695 = vunpack.c.l.b16 %v176
    %v696 = vunpack.c.l.b16 %v177
    %v697 = vunpack.c.l.b16 %v178
    %v698 = vunpack.c.l.b16 %v179
    %v699 = vunpack.c.l.b16 %v180
    %v700 = vunpack.c.l.b16 %v181
    %v701 = vunpack.c.l.b16 %v182
    %v702 = vunpack.c.l.b16 %v183
    %v703 = vunpack.c.l.b16 %v184
    %v704 = vunpack.c.l.b16 %v185
    %v705 = vunpack.c.l.b16 %v186
    %v706 = vunpack.c.l.b16 %v187
    %v707 = vunpack.c.l.b16 %v188
    %v708 = vunpack.c.l.b16 %v189
    %v709 = vunpack.c.l.b16 %v190
    %v710 = vunpack.c.l.b16 %v191
    %v711 = vunpack.c.l.b16 %v192
    %v712 = vunpack.c.l.b16 %v193
    %v713 = vunpack.c.l.b16 %v194
    %v714 = vunpack.c.l.b16 %v195
    %v715 = vunpack.c.l.b16 %v196
    %v716 = vunpack.c.l.b16 %v197
    %v717 = vunpack.c.l.b16 %v198
    %v718 = vunpack.c.l.b16 %v199
    %v719 = vunpack.c.l.b16 %v200
    %v720 = vunpack.c.l.b16 %v201
    %v721 = vunpack.c.l.b16 %v202
    %v722 = vunpack.c.l.b16 %v203
    %v723 = vunpack.c.l.b16 %v204
    %v724 = vunpack.c.l.b16 %v205
    %v725 = vunpack.c.l.b16 %v206
    %v726 = vunpack.c.l.b16 %v207
    %v727 = vunpack.c.l.b16 %v208
    %v728 = vunpack.c.l.b16 %v209
    %v729 = vunpack.c.l.b16 %v210
    %v730 = vunpack.c.l.b16 %v211
    %v731 = vunpack.c.l.b16 %v212
    %v732 = vunpack.c.l.b16 %v213
    %v733 = vunpack.c.l.b16 %v214
    %v734 = vunpack.c.l.b16 %v215
    %v735 = vunpack.c.l.b16 %v216
    %v736 = vunpack.c.l.b16 %v217
    %v737 = vunpack.c.l.b16 %v218
    %v738 = vunpack.c.l.b16 %v219
    %v739 = vunpack.c.l.b16 %v220
    %v740 = vunpack.c.l.b16 %v221
    %v741 = vunpack.c.l.b16 %v222
    %v742 = vunpack.c.l.b16 %v223
    %v743 = vunpack.c.l.b16 %v224
    %v744 = vunpack.c.l.b16 %v225
    %v745 = vunpack.c.l.b16 %v226
    %v746 = vunpack.c.l.b16 %v227
    %v747 = vunpack.c.l.b16 %v228
    %v748 = vunpack.c.l.b16 %v229
    %v749 = vunpack.c.l.b16 %v230
    %v750 = vunpack.c.l.b16 %v231
    %v751 = vunpack.c.l.b16 %v232
    %v752 = vunpack.c.l.b16 %v233
    %v753 = vunpack.c.l.b16 %v234
    %v754 = vunpack.c.l.b16 %v235
    %v755 = vunpack.c.l.b16 %v236
    %v756 = vunpack.c.l.b16 %v237
    %v757 = vunpack.c.l.b16 %v238
    %v758 = vunpack.c.l.b16 %v239
    %v759 = vunpack.c.l.b16 %v240
    %v760 = vunpack.c.l.b16 %v241
    %v761 = vunpack.c.l.b16 %v242
    %v762 = vunpack.c.l.b16 %v243
    %v763 = vunpack.c.l.b16 %v244
    %v764 = vunpack.c.l.b16 %v245
    %v765 = vunpack.c.l.b16 %v246
    %v766 = vunpack.c.l.b16 %v247
    %v767 = vunpack.c.l.b16 %v248
    %v768 = vunpack.c.l.b16 %v249
    %v769 = vunpack.c.l.b16 %v250
    %v770 = vunpack.c.l.b16 %v251
    %v771 = vunpack.c.l.b16 %v252
    %v772 = vunpack.c.l.b16 %v253
    %v773 = vunpack.c.l.b16 %v254
    %v774 = vunpack.c.l.b16 %v255
    %v775 = vunpack.c.l.b16 %v256
    %v776 = vunpack.c.l.b16 %v257
    %v777 = vunpack.c.l.b16 %v258
    %v778 = vunpack.c.l.b16 %v259
    %v779 = vunpack.c.l.b16 %v260
    %v780 = vunpack.c.l.b16 %v261
    %v781 = vunpack.c.l.b16 %v262
    %v782 = vunpack.c.l.b16 %v263
    %v783 = vunpack.c.l.b16 %v264
    %v784 = vunpack.c.l.b16 %v265
    %v785 = vunpack.c.l.b16 %v266
    %v786 = vunpack.c.l.b16 %v267
    %v787 = vunpack.c.l.b16 %v268
    %v788 = vunpack.c.l.b16 %v269
    %v789 = vunpack.c.l.b16 %v270
    %v790 = vunpack.c.l.b16 %v271
    %v791 = vunpack.c.l.b16 %v272
    %v792 = vunpack.c.l.b16 %v273
    %v793 = vunpack.c.l.b16 %v274
    %v794 = vunpack.c.l.b16 %v275
    %v795 = vunpack.c.l.b16 %v276
    %v796 = vunpack.c.l.b16 %v277
    %v797 = vunpack.c.l.b16 %v278
    %v798 = vunpack.c.l.b16 %v279
    %v799 = vunpack.c.l.b16 %v280
    %v800 = vunpack.c.l.b16 %v281
    %v801 = vunpack.c.l.b16 %v282
    %v802 = vunpack.c.l.b16 %v283
    %v803 = vunpack.c.l.b16 %v284
    %v804 = vunpack.c.l.b16 %v285
    %v805 = vunpack.c.l.b16 %v286
    %v806 = vunpack.c.l.b16 %v287
    %v807 = vunpack.c.l.b16 %v288
    %v808 = vunpack.c.l.b16 %v289
    %v809 = vunpack.c.l.b16 %v290
    %v810 = vunpack.c.l.b16 %v291
    %v811 = vunpack.c.l.b16 %v292
    %v812 = vunpack.c.l.b16 %v293
    %v813 = vunpack.c.l.b16 %v294
    %v814 = vunpack.c.l.b16 %v295
    %v815 = vunpack.c.l.b16 %v296
    %v816 = vunpack.c.l.b16 %v297
    %v817 = vunpack.c.l.b16 %v298
    %v818 = vunpack.c.l.b16 %v299
    %v819 = vunpack.c.l.b16 %v300
    %v820 = vunpack.c.l.b16 %v301
    %v821 = vunpack.c.l.b16 %v302
    %v822 = vunpack.c.l.b16 %v303
    %v823 = vunpack.c.l.b16 %v304
    %v824 = vunpack.c.l.b16 %v305
    %v825 = vunpack.c.l.b16 %v306
    %v826 = vunpack.c.l.b16 %v307
    %v827 = vunpack.c.l.b16 %v308
    %v828 = vunpack.c.l.b16 %v309
    %v829 = vunpack.c.l.b16 %v310
    %v830 = vunpack.c.l.b16 %v311
    %v831 = vunpack.c.l.b16 %v312
    %v832 = vunpack.c.l.b16 %v313
    %v833 = vunpack.c.l.b16 %v314
    %v834 = vunpack.c.l.b16 %v315
    %v835 = vunpack.c.l.b16 %v316
    %v836 = vunpack.c.l.b16 %v317
    %v837 = vunpack.c.l.b16 %v318
    %v838 = vunpack.c.l.b16 %v319
    %v839 = vunpack.c.l.b16 %v320
    %v840 = vunpack.c.l.b16 %v321
    %v841 = vunpack.c.l.b16 %v322
    %v842 = vunpack.c.l.b16 %v323
    %v843 = vunpack.c.l.b16 %v324
    %v844 = vunpack.c.l.b16 %v325
    %v845 = vunpack.c.l.b16 %v326
    %v846 = vunpack.c.l.b16 %v327
    %v847 = vunpack.c.l.b16 %v328
    %v848 = vunpack.c.l.b16 %v329
    %v849 = vpack.c.b16 %v594, %v593
    %v850 = vpack.c.b16 %v596, %v595
    %v851 = vpack.c.b16 %v598, %v597
    %v852 = vpack.c.b16 %v600, %v599
    %v853 = vpack.c.b16 %v602, %v601
    %v854 = vpack.c.b16 %v604, %v603
    %v855 = vpack.c.b16 %v606, %v605
    %v856 = vpack.c.b16 %v608, %v607
    %v857 = vpack.c.b16 %v610, %v609
    %v858 = vpack.c.b16 %v612, %v611
    %v859 = vpack.c.b16 %v614, %v613
    %v860 = vpack.c.b16 %v616, %v615
    %v861 = vpack.c.b16 %v618, %v617
    %v862 = vpack.c.b16 %v620, %v619
    %v863 = vpack.c.b16 %v622, %v621
    %v864 = vpack.c.b16 %v624, %v623
    %v865 = vpack.c.b16 %v626, %v625
    %v866 = vpack.c.b16 %v628, %v627
    %v867 = vpack.c.b16 %v630, %v629
    %v868 = vpack.c.b16 %v632, %v631
    %v869 = vpack.c.b16 %v634, %v633
    %v870 = vpack.c.b16 %v636, %v635
    %v871 = vpack.c.b16 %v638, %v637
    %v872 = vpack.c.b16 %v640, %v639
    %v873 = vpack.c.b16 %v642, %v641
    %v874 = vpack.c.b16 %v644, %v643
    %v875 = vpack.c.b16 %v646, %v645
    %v876 = vpack.c.b16 %v648, %v647
    %v877 = vpack.c.b16 %v650, %v649
    %v878 = vpack.c.b16 %v652, %v651
    %v879 = vpack.c.b16 %v654, %v653
    %v880 = vpack.c.b16 %v656, %v655
    %v881 = vpack.c.b16 %v658, %v657
    %v882 = vpack.c.b16 %v660, %v659
    %v883 = vpack.c.b16 %v662, %v661
    %v884 = vpack.c.b16 %v664, %v663
    %v885 = vpack.c.b16 %v666, %v665
    %v886 = vpack.c.b16 %v668, %v667
    %v887 = vpack.c.b16 %v670, %v669
    %v888 = vpack.c.b16 %v672, %v671
    %v889 = vpack.c.b16 %v674, %v673
    %v890 = vpack.c.b16 %v676, %v675
    %v891 = vpack.c.b16 %v678, %v677
    %v892 = vpack.c.b16 %v680, %v679
    %v893 = vpack.c.b16 %v682, %v681
    %v894 = vpack.c.b16 %v684, %v683
    %v895 = vpack.c.b16 %v686, %v685
    %v896 = vpack.c.b16 %v688, %v687
    %v897 = vpack.c.b16 %v690, %v689
    %v898 = vpack.c.b16 %v692, %v691
    %v899 = vpack.c.b16 %v694, %v693
    %v900 = vpack.c.b16 %v696, %v695
    %v901 = vpack.c.b16 %v698, %v697
    %v902 = vpack.c.b16 %v700, %v699
    %v903 = vpack.c.b16 %v702, %v701
    %v904 = vpack.c.b16 %v704, %v703
    %v905 = vpack.c.b16 %v706, %v705
    %v906 = vpack.c.b16 %v708, %v707
    %v907 = vpack.c.b16 %v710, %v709
    %v908 = vpack.c.b16 %v712, %v711
    %v909 = vpack.c.b16 %v714, %v713
    %v910 = vpack.c.b16 %v716, %v715
    %v911 = vpack.c.b16 %v718, %v717
    %v912 = vpack.c.b16 %v720, %v719
    %v913 = vpack.c.b16 %v722, %v721
    %v914 = vpack.c.b16 %v724, %v723
    %v915 = vpack.c.b16 %v726, %v725
    %v916 = vpack.c.b16 %v728, %v727
    %v917 = vpack.c.b16 %v730, %v729
    %v918 = vpack.c.b16 %v732, %v731
    %v919 = vpack.c.b16 %v734, %v733
    %v920 = vpack.c.b16 %v736, %v735
    %v921 = vpack.c.b16 %v738, %v737
    %v922 = vpack.c.b16 %v740, %v739
    %v923 = vpack.c.b16 %v742, %v741
    %v924 = vpack.c.b16 %v744, %v743
    %v925 = vpack.c.b16 %v746, %v745
    %v926 = vpack.c.b16 %v748, %v747
    %v927 = vpack.c.b16 %v750, %v749
    %v928 = vpack.c.b16 %v752, %v751
    %v929 = vpack.c.b16 %v754, %v753
    %v930 = vpack.c.b16 %v756, %v755
    %v931 = vpack.c.b16 %v758, %v757
    %v932 = vpack.c.b16 %v760, %v759
    %v933 = vpack.c.b16 %v762, %v761
    %v934 = vpack.c.b16 %v764, %v763
    %v935 = vpack.c.b16 %v766, %v765
    %v936 = vpack.c.b16 %v768, %v767
    %v937 = vpack.c.b16 %v770, %v769
    %v938 = vpack.c.b16 %v772, %v771
    %v939 = vpack.c.b16 %v774, %v773
    %v940 = vpack.c.b16 %v776, %v775
    %v941 = vpack.c.b16 %v778, %v777
    %v942 = vpack.c.b16 %v780, %v779
    %v943 = vpack.c.b16 %v782, %v781
    %v944 = vpack.c.b16 %v784, %v783
    %v945 = vpack.c.b16 %v786, %v785
    %v946 = vpack.c.b16 %v788, %v787
    %v947 = vpack.c.b16 %v790, %v789
    %v948 = vpack.c.b16 %v792, %v791
    %v949 = vpack.c.b16 %v794, %v793
    %v950 = vpack.c.b16 %v796, %v795
    %v951 = vpack.c.b16 %v798, %v797
    %v952 = vpack.c.b16 %v800, %v799
    %v953 = vpack.c.b16 %v802, %v801
    %v954 = vpack.c.b16 %v804, %v803
    %v955 = vpack.c.b16 %v806, %v805
    %v956 = vpack.c.b16 %v808, %v807
    %v957 = vpack.c.b16 %v810, %v809
    %v958 = vpack.c.b16 %v812, %v811
    %v959 = vpack.c.b16 %v814, %v813
    %v960 = vpack.c.b16 %v816, %v815
    %v961 = vpack.c.b16 %v818, %v817
    %v962 = vpack.c.b16 %v820, %v819
    %v963 = vpack.c.b16 %v822, %v821
    %v964 = vpack.c.b16 %v824, %v823
    %v965 = vpack.c.b16 %v826, %v825
    %v966 = vpack.c.b16 %v828, %v827
    %v967 = vpack.c.b16 %v830, %v829
    %v968 = vpack.c.b16 %v832, %v831
    %v969 = vpack.c.b16 %v834, %v833
    %v970 = vpack.c.b16 %v836, %v835
    %v971 = vpack.c.b16 %v838, %v837
    %v972 = vpack.c.b16 %v840, %v839
    %v973 = vpack.c.b16 %v842, %v841
    %v974 = vpack.c.b16 %v844, %v843
    %v975 = vpack.c.b16 %v846, %v845
    %v976 = vpack.c.b16 %v848, %v847
    %1105 = vmatprep.subr.bf16.mxu0 0
    %1106 = vmatpush1.bf16.msra.mxu0 %v856
    %1107 = vmatprep.subr.bf16.mxu0 0
    %1108 = vmatpush1.bf16.msra.mxu0 %v855
    %1109 = vmatprep.subr.bf16.mxu0 0
    %1110 = vmatpush1.bf16.msra.mxu0 %v854
    %1111 = vmatprep.subr.bf16.mxu0 0
    %1112 = vmatpush1.bf16.msra.mxu0 %v853
    %1113 = vmatprep.subr.bf16.mxu0 0
    %1114 = vmatpush1.bf16.msra.mxu0 %v852
    %1115 = vmatprep.subr.bf16.mxu0 0
    %1116 = vmatpush1.bf16.msra.mxu0 %v851
    %1117 = vmatprep.subr.bf16.mxu0 0
    %1118 = vmatpush1.bf16.msra.mxu0 %v850
    %1119 = vmatprep.subr.bf16.mxu0 0
    %1120 = vmatpush1.bf16.msra.mxu0 %v849
    %1121 = vmatprep.subr.bf16.mxu0 0
    %1122 = vmatpush2.bf16.msra.mxu0 %v864
    %1123 = vmatprep.subr.bf16.mxu0 0
    %1124 = vmatpush2.bf16.msra.mxu0 %v863
    %1125 = vmatprep.subr.bf16.mxu0 0
    %1126 = vmatpush2.bf16.msra.mxu0 %v862
    %1127 = vmatprep.subr.bf16.mxu0 0
    %1128 = vmatpush2.bf16.msra.mxu0 %v861
    %1129 = vmatprep.subr.bf16.mxu0 0
    %1130 = vmatpush2.bf16.msra.mxu0 %v860
    %1131 = vmatprep.subr.bf16.mxu0 0
    %1132 = vmatpush2.bf16.msra.mxu0 %v859
    %1133 = vmatprep.subr.bf16.mxu0 0
    %1134 = vmatpush2.bf16.msra.mxu0 %v858
    %1135 = vmatprep.subr.bf16.mxu0 0
    %1136 = vmatpush2.bf16.msra.mxu0 %v857
    %1137 = vmatprep.mubr.bf16.mxu0 %v59
    %1138 = vmatmul.mubr.bf16.gmra.mxu0 %v58
    %v1139 = vpop.f32.mrf.mxu0
    %v1140 = vadd.f32 %v335, %v1139
    %v1141 = vpop.f32.mrf.mxu0
    %v1142 = vpop.f32.mrf.mxu0
    %v1143 = vpop.f32.mrf.mxu0
    %1144 = vdwg.mxu0
    %1145 = vmatprep.subr.bf16.mxu0 0
    %1146 = vmatpush1.bf16.msra.mxu0 %v872
    %1147 = vmatprep.subr.bf16.mxu0 0
    %1148 = vmatpush1.bf16.msra.mxu0 %v871
    %1149 = vmatprep.subr.bf16.mxu0 0
    %1150 = vmatpush1.bf16.msra.mxu0 %v870
    %1151 = vmatprep.subr.bf16.mxu0 0
    %1152 = vmatpush1.bf16.msra.mxu0 %v869
    %1153 = vmatprep.subr.bf16.mxu0 0
    %1154 = vmatpush1.bf16.msra.mxu0 %v868
    %1155 = vmatprep.subr.bf16.mxu0 0
    %1156 = vmatpush1.bf16.msra.mxu0 %v867
    %1157 = vmatprep.subr.bf16.mxu0 0
    %1158 = vmatpush1.bf16.msra.mxu0 %v866
    %1159 = vmatprep.subr.bf16.mxu0 0
    %1160 = vmatpush1.bf16.msra.mxu0 %v865
    %1161 = vmatprep.subr.bf16.mxu0 0
    %1162 = vmatpush2.bf16.msra.mxu0 %v880
    %1163 = vmatprep.subr.bf16.mxu0 0
    %1164 = vmatpush2.bf16.msra.mxu0 %v879
    %1165 = vmatprep.subr.bf16.mxu0 0
    %1166 = vmatpush2.bf16.msra.mxu0 %v878
    %1167 = vmatprep.subr.bf16.mxu0 0
    %1168 = vmatpush2.bf16.msra.mxu0 %v877
    %1169 = vmatprep.subr.bf16.mxu0 0
    %1170 = vmatpush2.bf16.msra.mxu0 %v876
    %1171 = vmatprep.subr.bf16.mxu0 0
    %1172 = vmatpush2.bf16.msra.mxu0 %v875
    %1173 = vmatprep.subr.bf16.mxu0 0
    %1174 = vmatpush2.bf16.msra.mxu0 %v874
    %1175 = vmatprep.subr.bf16.mxu0 0
    %1176 = vmatpush2.bf16.msra.mxu0 %v873
    %1177 = vmatprep.mubr.bf16.mxu0 %v61
    %1178 = vmatmul.mubr.bf16.gmra.mxu0 %v60
    %v1179 = vpop.f32.mrf.mxu0
    %v1180 = vadd.f32 %v1140, %v1179
    %v1181 = vpop.f32.mrf.mxu0
    %v1182 = vpop.f32.mrf.mxu0
    %v1183 = vpop.f32.mrf.mxu0
    %1184 = vdwg.mxu0
    %1185 = vmatprep.subr.bf16.mxu0 0
    %1186 = vmatpush1.bf16.msra.mxu0 %v888
    %1187 = vmatprep.subr.bf16.mxu0 0
    %1188 = vmatpush1.bf16.msra.mxu0 %v887
    %1189 = vmatprep.subr.bf16.mxu0 0
    %1190 = vmatpush1.bf16.msra.mxu0 %v886
    %1191 = vmatprep.subr.bf16.mxu0 0
    %1192 = vmatpush1.bf16.msra.mxu0 %v885
    %1193 = vmatprep.subr.bf16.mxu0 0
    %1194 = vmatpush1.bf16.msra.mxu0 %v884
    %1195 = vmatprep.subr.bf16.mxu0 0
    %1196 = vmatpush1.bf16.msra.mxu0 %v883
    %1197 = vmatprep.subr.bf16.mxu0 0
    %1198 = vmatpush1.bf16.msra.mxu0 %v882
    %1199 = vmatprep.subr.bf16.mxu0 0
    %1200 = vmatpush1.bf16.msra.mxu0 %v881
    %1201 = vmatprep.subr.bf16.mxu0 0
    %1202 = vmatpush2.bf16.msra.mxu0 %v896
    %1203 = vmatprep.subr.bf16.mxu0 0
    %1204 = vmatpush2.bf16.msra.mxu0 %v895
    %1205 = vmatprep.subr.bf16.mxu0 0
    %1206 = vmatpush2.bf16.msra.mxu0 %v894
    %1207 = vmatprep.subr.bf16.mxu0 0
    %1208 = vmatpush2.bf16.msra.mxu0 %v893
    %1209 = vmatprep.subr.bf16.mxu0 0
    %1210 = vmatpush2.bf16.msra.mxu0 %v892
    %1211 = vmatprep.subr.bf16.mxu0 0
    %1212 = vmatpush2.bf16.msra.mxu0 %v891
    %1213 = vmatprep.subr.bf16.mxu0 0
    %1214 = vmatpush2.bf16.msra.mxu0 %v890
    %1215 = vmatprep.subr.bf16.mxu0 0
    %1216 = vmatpush2.bf16.msra.mxu0 %v889
    %1217 = vmatprep.mubr.bf16.mxu0 %v63
    %1218 = vmatmul.mubr.bf16.gmra.mxu0 %v62
    %v1219 = vpop.f32.mrf.mxu0
    %v1220 = vadd.f32 %v1180, %v1219
    %v1221 = vpop.f32.mrf.mxu0
    %v1222 = vpop.f32.mrf.mxu0
    %v1223 = vpop.f32.mrf.mxu0
    %1224 = vdwg.mxu0
    %1225 = vmatprep.subr.bf16.mxu0 0
    %1226 = vmatpush1.bf16.msra.mxu0 %v904
    %1227 = vmatprep.subr.bf16.mxu0 0
    %1228 = vmatpush1.bf16.msra.mxu0 %v903
    %1229 = vmatprep.subr.bf16.mxu0 0
    %1230 = vmatpush1.bf16.msra.mxu0 %v902
    %1231 = vmatprep.subr.bf16.mxu0 0
    %1232 = vmatpush1.bf16.msra.mxu0 %v901
    %1233 = vmatprep.subr.bf16.mxu0 0
    %1234 = vmatpush1.bf16.msra.mxu0 %v900
    %1235 = vmatprep.subr.bf16.mxu0 0
    %1236 = vmatpush1.bf16.msra.mxu0 %v899
    %1237 = vmatprep.subr.bf16.mxu0 0
    %1238 = vmatpush1.bf16.msra.mxu0 %v898
    %1239 = vmatprep.subr.bf16.mxu0 0
    %1240 = vmatpush1.bf16.msra.mxu0 %v897
    %1241 = vmatprep.subr.bf16.mxu0 0
    %1242 = vmatpush2.bf16.msra.mxu0 %v912
    %1243 = vmatprep.subr.bf16.mxu0 0
    %1244 = vmatpush2.bf16.msra.mxu0 %v911
    %1245 = vmatprep.subr.bf16.mxu0 0
    %1246 = vmatpush2.bf16.msra.mxu0 %v910
    %1247 = vmatprep.subr.bf16.mxu0 0
    %1248 = vmatpush2.bf16.msra.mxu0 %v909
    %1249 = vmatprep.subr.bf16.mxu0 0
    %1250 = vmatpush2.bf16.msra.mxu0 %v908
    %1251 = vmatprep.subr.bf16.mxu0 0
    %1252 = vmatpush2.bf16.msra.mxu0 %v907
    %1253 = vmatprep.subr.bf16.mxu0 0
    %1254 = vmatpush2.bf16.msra.mxu0 %v906
    %1255 = vmatprep.subr.bf16.mxu0 0
    %1256 = vmatpush2.bf16.msra.mxu0 %v905
    %1257 = vmatprep.mubr.bf16.mxu0 %v65
    %1258 = vmatmul.mubr.bf16.gmra.mxu0 %v64
    %v1259 = vpop.f32.mrf.mxu0
    %v1260 = vadd.f32 %v1220, %v1259
    %v1261 = vpop.f32.mrf.mxu0
    %v1262 = vpop.f32.mrf.mxu0
    %v1263 = vpop.f32.mrf.mxu0
    %1264 = vdwg.mxu0
    %1265 = vmatprep.subr.bf16.mxu0 0
    %1266 = vmatpush1.bf16.msra.mxu0 %v920
    %1267 = vmatprep.subr.bf16.mxu0 0
    %1268 = vmatpush1.bf16.msra.mxu0 %v919
    %1269 = vmatprep.subr.bf16.mxu0 0
    %1270 = vmatpush1.bf16.msra.mxu0 %v918
    %1271 = vmatprep.subr.bf16.mxu0 0
    %1272 = vmatpush1.bf16.msra.mxu0 %v917
    %1273 = vmatprep.subr.bf16.mxu0 0
    %1274 = vmatpush1.bf16.msra.mxu0 %v916
    %1275 = vmatprep.subr.bf16.mxu0 0
    %1276 = vmatpush1.bf16.msra.mxu0 %v915
    %1277 = vmatprep.subr.bf16.mxu0 0
    %1278 = vmatpush1.bf16.msra.mxu0 %v914
    %1279 = vmatprep.subr.bf16.mxu0 0
    %1280 = vmatpush1.bf16.msra.mxu0 %v913
    %1281 = vmatprep.subr.bf16.mxu0 0
    %1282 = vmatpush2.bf16.msra.mxu0 %v928
    %1283 = vmatprep.subr.bf16.mxu0 0
    %1284 = vmatpush2.bf16.msra.mxu0 %v927
    %1285 = vmatprep.subr.bf16.mxu0 0
    %1286 = vmatpush2.bf16.msra.mxu0 %v926
    %1287 = vmatprep.subr.bf16.mxu0 0
    %1288 = vmatpush2.bf16.msra.mxu0 %v925
    %1289 = vmatprep.subr.bf16.mxu0 0
    %1290 = vmatpush2.bf16.msra.mxu0 %v924
    %1291 = vmatprep.subr.bf16.mxu0 0
    %1292 = vmatpush2.bf16.msra.mxu0 %v923
    %1293 = vmatprep.subr.bf16.mxu0 0
    %1294 = vmatpush2.bf16.msra.mxu0 %v922
    %1295 = vmatprep.subr.bf16.mxu0 0
    %1296 = vmatpush2.bf16.msra.mxu0 %v921
    %1297 = vmatprep.mubr.bf16.mxu0 %v67
    %1298 = vmatmul.mubr.bf16.gmra.mxu0 %v66
    %v1299 = vpop.f32.mrf.mxu0
    %v1300 = vadd.f32 %v1260, %v1299
    %v1301 = vpop.f32.mrf.mxu0
    %v1302 = vpop.f32.mrf.mxu0
    %v1303 = vpop.f32.mrf.mxu0
    %1304 = vdwg.mxu0
    %1305 = vmatprep.subr.bf16.mxu0 0
    %1306 = vmatpush1.bf16.msra.mxu0 %v936
    %1307 = vmatprep.subr.bf16.mxu0 0
    %1308 = vmatpush1.bf16.msra.mxu0 %v935
    %1309 = vmatprep.subr.bf16.mxu0 0
    %1310 = vmatpush1.bf16.msra.mxu0 %v934
    %1311 = vmatprep.subr.bf16.mxu0 0
    %1312 = vmatpush1.bf16.msra.mxu0 %v933
    %1313 = vmatprep.subr.bf16.mxu0 0
    %1314 = vmatpush1.bf16.msra.mxu0 %v932
    %1315 = vmatprep.subr.bf16.mxu0 0
    %1316 = vmatpush1.bf16.msra.mxu0 %v931
    %1317 = vmatprep.subr.bf16.mxu0 0
    %1318 = vmatpush1.bf16.msra.mxu0 %v930
    %1319 = vmatprep.subr.bf16.mxu0 0
    %1320 = vmatpush1.bf16.msra.mxu0 %v929
    %1321 = vmatprep.subr.bf16.mxu0 0
    %1322 = vmatpush2.bf16.msra.mxu0 %v944
    %1323 = vmatprep.subr.bf16.mxu0 0
    %1324 = vmatpush2.bf16.msra.mxu0 %v943
    %1325 = vmatprep.subr.bf16.mxu0 0
    %1326 = vmatpush2.bf16.msra.mxu0 %v942
    %1327 = vmatprep.subr.bf16.mxu0 0
    %1328 = vmatpush2.bf16.msra.mxu0 %v941
    %1329 = vmatprep.subr.bf16.mxu0 0
    %1330 = vmatpush2.bf16.msra.mxu0 %v940
    %1331 = vmatprep.subr.bf16.mxu0 0
    %1332 = vmatpush2.bf16.msra.mxu0 %v939
    %1333 = vmatprep.subr.bf16.mxu0 0
    %1334 = vmatpush2.bf16.msra.mxu0 %v938
    %1335 = vmatprep.subr.bf16.mxu0 0
    %1336 = vmatpush2.bf16.msra.mxu0 %v937
    %1337 = vmatprep.mubr.bf16.mxu0 %v69
    %1338 = vmatmul.mubr.bf16.gmra.mxu0 %v68
    %v1339 = vpop.f32.mrf.mxu0
    %v1340 = vadd.f32 %v1300, %v1339
    %v1341 = vpop.f32.mrf.mxu0
    %v1342 = vpop.f32.mrf.mxu0
    %v1343 = vpop.f32.mrf.mxu0
    %1344 = vdwg.mxu0
    %1345 = vmatprep.subr.bf16.mxu0 0
    %1346 = vmatpush1.bf16.msra.mxu0 %v952
    %1347 = vmatprep.subr.bf16.mxu0 0
    %1348 = vmatpush1.bf16.msra.mxu0 %v951
    %1349 = vmatprep.subr.bf16.mxu0 0
    %1350 = vmatpush1.bf16.msra.mxu0 %v950
    %1351 = vmatprep.subr.bf16.mxu0 0
    %1352 = vmatpush1.bf16.msra.mxu0 %v949
    %1353 = vmatprep.subr.bf16.mxu0 0
    %1354 = vmatpush1.bf16.msra.mxu0 %v948
    %1355 = vmatprep.subr.bf16.mxu0 0
    %1356 = vmatpush1.bf16.msra.mxu0 %v947
    %1357 = vmatprep.subr.bf16.mxu0 0
    %1358 = vmatpush1.bf16.msra.mxu0 %v946
    %1359 = vmatprep.subr.bf16.mxu0 0
    %1360 = vmatpush1.bf16.msra.mxu0 %v945
    %1361 = vmatprep.subr.bf16.mxu0 0
    %1362 = vmatpush2.bf16.msra.mxu0 %v960
    %1363 = vmatprep.subr.bf16.mxu0 0
    %1364 = vmatpush2.bf16.msra.mxu0 %v959
    %1365 = vmatprep.subr.bf16.mxu0 0
    %1366 = vmatpush2.bf16.msra.mxu0 %v958
    %1367 = vmatprep.subr.bf16.mxu0 0
    %1368 = vmatpush2.bf16.msra.mxu0 %v957
    %1369 = vmatprep.subr.bf16.mxu0 0
    %1370 = vmatpush2.bf16.msra.mxu0 %v956
    %1371 = vmatprep.subr.bf16.mxu0 0
    %1372 = vmatpush2.bf16.msra.mxu0 %v955
    %1373 = vmatprep.subr.bf16.mxu0 0
    %1374 = vmatpush2.bf16.msra.mxu0 %v954
    %1375 = vmatprep.subr.bf16.mxu0 0
    %1376 = vmatpush2.bf16.msra.mxu0 %v953
    %1377 = vmatprep.mubr.bf16.mxu0 %v71
    %1378 = vmatmul.mubr.bf16.gmra.mxu0 %v70
    %v1379 = vpop.f32.mrf.mxu0
    %v1380 = vadd.f32 %v1340, %v1379
    %v1381 = vpop.f32.mrf.mxu0
    %v1382 = vpop.f32.mrf.mxu0
    %v1383 = vpop.f32.mrf.mxu0
    %1384 = vdwg.mxu0
    %1385 = vmatprep.subr.bf16.mxu0 0
    %1386 = vmatpush1.bf16.msra.mxu0 %v968
    %1387 = vmatprep.subr.bf16.mxu0 0
    %1388 = vmatpush1.bf16.msra.mxu0 %v967
    %1389 = vmatprep.subr.bf16.mxu0 0
    %1390 = vmatpush1.bf16.msra.mxu0 %v966
    %1391 = vmatprep.subr.bf16.mxu0 0
    %1392 = vmatpush1.bf16.msra.mxu0 %v965
    %1393 = vmatprep.subr.bf16.mxu0 0
    %1394 = vmatpush1.bf16.msra.mxu0 %v964
    %1395 = vmatprep.subr.bf16.mxu0 0
    %1396 = vmatpush1.bf16.msra.mxu0 %v963
    %1397 = vmatprep.subr.bf16.mxu0 0
    %1398 = vmatpush1.bf16.msra.mxu0 %v962
    %1399 = vmatprep.subr.bf16.mxu0 0
    %1400 = vmatpush1.bf16.msra.mxu0 %v961
    %1401 = vmatprep.subr.bf16.mxu0 0
    %1402 = vmatpush2.bf16.msra.mxu0 %v976
    %1403 = vmatprep.subr.bf16.mxu0 0
    %1404 = vmatpush2.bf16.msra.mxu0 %v975
    %1405 = vmatprep.subr.bf16.mxu0 0
    %1406 = vmatpush2.bf16.msra.mxu0 %v974
    %1407 = vmatprep.subr.bf16.mxu0 0
    %1408 = vmatpush2.bf16.msra.mxu0 %v973
    %1409 = vmatprep.subr.bf16.mxu0 0
    %1410 = vmatpush2.bf16.msra.mxu0 %v972
    %1411 = vmatprep.subr.bf16.mxu0 0
    %1412 = vmatpush2.bf16.msra.mxu0 %v971
    %1413 = vmatprep.subr.bf16.mxu0 0
    %1414 = vmatpush2.bf16.msra.mxu0 %v970
    %1415 = vmatprep.subr.bf16.mxu0 0
    %1416 = vmatpush2.bf16.msra.mxu0 %v969
    %1417 = vmatprep.mubr.bf16.mxu0 %v73
    %1418 = vmatmul.mubr.bf16.gmra.mxu0 %v72
    %v1419 = vpop.f32.mrf.mxu0
    %v1420 = vadd.f32 %v1380, %v1419
    %v1421 = vpop.f32.mrf.mxu0
    %v1422 = vpop.f32.mrf.mxu0
    %v1423 = vpop.f32.mrf.mxu0
    %1424 = vdwg.mxu0
    %1425 = vst [vmem:[#allocation7] sm:$0xff] %v1420
    // Predicated region
    $region22: #{rank_forward.1} parent=1 // pred_check
      _
    $region23: #{rank_forward.1} parent=1 // pred_check_branch
      %1427 = sbr.rel (0) target = $region25
    $region24: #{rank_forward.1} parent=1 // pred_region
      %s1429 = ssub.s32 128, 128
      %1430 = vsyncadd [#allocation4], %s1429
      %s1432 = sshll.u32 [#allocation7], 4
      %s1433 = int_to_ptr.vmem [resolvable:$true] %s1432
      %1435 = dma.vmem_to_hbm [thread:$0]  %s1433, 128, %s3, [#allocation4]
    $region25: #{rank_forward.1} parent=1 // pred_fallthru
      _
    // Predicated region
    $region26: #{rank_forward.1} parent=1 // pred_check
      _
    $region27: #{rank_forward.1} parent=1 // pred_check_branch
      %1437 = sbr.rel (0) target = $region29
    $region28: #{rank_forward.1} parent=1 // pred_region
      %1438 = dma.done [#allocation4], 128
    $region29: #{rank_forward.1} parent=1 // pred_fallthru
      _
    %1439 = vsyncpa [#allocation3], 1
    %1440 = vsyncpa [#allocation6], 1
    %1441 = vsyncpa [#allocation4], 1

</llo_original>
